<compile_context>
chip_gen: v6e
topology: v6e:2x2x1
jax: 0.10.0
libtpu: 0.0.40
codegen_flags: <defaults>
</compile_context>

<pallas_src>
import jax
import jax.numpy as jnp
from jax.experimental import pallas as pl
from jax.experimental.pallas import tpu as pltpu

# ---------------- config (mirrors nn/model.py `config`) ----------------
BATCH = 8                       # obs.shape[0]
PENDING_NUM = 8                 # config.pending_num
HIDDEN_DIM = 32                 # config.hidden_dim == preprocess_net_output_dim
ACTION_DIM = 16                 # config.one_discrete_action_space == prod(action_shape)

VMEM = pltpu.MemorySpace.VMEM


# ---------------- fused Pallas kernel (whole Actor.forward) ----------------

def actor_kernel(logits_ref, w1_ref, b1_ref, w2_ref, b2_ref,
                 job_types_ref, first_job_ref, amask_ref,
                 idx_out_ref, alloc_out_ref):
    # logits:[B*P,H] w1:[H,H] b1:[1,H] w2:[H,A] b2:[1,A]
    # job_types:[B,P] i32   first_job:[B,1] i32   amask:[B*P,A] i32
    # idx_out:[B,P] f32     alloc_out:[B*P,A] f32
    neg_inf = jnp.float32(-jnp.inf)
    B, P = idx_out_ref.shape
    BP = alloc_out_ref.shape[0]

    # ---- skip mask computed in-kernel from job_types (host numpy in torch) ----
    nonempty = (job_types_ref[...] != -1).astype(jnp.float32)        # (B, P)
    cnt = jnp.sum(nonempty, axis=-1, keepdims=True)                  # (B, 1) per-batch job count
    skip_b = cnt == 0.0                                              # (B, 1) bool

    # Per-row skip flags: expand the per-batch job flags to (B*P) rows with a
    # tiny one-hot matmul (MXU is idle anyway) — no host-side repeat, no reshape.
    r_iota = jax.lax.broadcasted_iota(jnp.int32, (BP, B), 0)
    b_iota = jax.lax.broadcasted_iota(jnp.int32, (BP, B), 1)
    sel = jnp.logical_and(r_iota >= b_iota * P, r_iota < (b_iota + 1) * P)
    row_jobs = jnp.dot(sel.astype(jnp.float32), nonempty,
                       preferred_element_type=jnp.float32)           # (BP, P)
    skip_row = jnp.sum(row_jobs, axis=-1, keepdims=True) == 0.0      # (BP, 1) bool

    # ---- self.last: Linear -> ReLU -> Linear, all rows in one MXU pass each ----
    h = jnp.dot(logits_ref[...], w1_ref[...],
                preferred_element_type=jnp.float32) + b1_ref[...]
    h = jnp.maximum(h, 0.0)                                          # F.relu
    alloc = jnp.dot(h, w2_ref[...],
                    preferred_element_type=jnp.float32) + b2_ref[...]

    # single select pass: allowed & not-skipped keeps the logit,
    # skipped rows -> 0, disallowed actions -> -inf
    valid = jnp.logical_and(amask_ref[...] != 0, jnp.logical_not(skip_row))
    else_val = jnp.where(skip_row, 0.0, neg_inf)                     # (BP, 1)
    alloc_out_ref[...] = jnp.where(valid, alloc, else_val)

    # ---- toy index logits: 0 at first_job column, -inf elsewhere, 0 if skipped ----
    col = jax.lax.broadcasted_iota(jnp.int32, (B, P), 1)
    hit = col == first_job_ref[...]
    idx_out_ref[...] = jnp.where(jnp.logical_or(hit, skip_b), 0.0, neg_inf)


# ---------------- wrapper (one pallas_call, one jitted dispatch) ----------------

@jax.jit
def _actor_forward_core(params, logits, job_types, first_job, alloc_mask):
    B, P = job_types.shape
    A = params["w2"].shape[-1]

    idx, alloc = pl.pallas_call(
        actor_kernel,
        out_shape=(jax.ShapeDtypeStruct((B, P), jnp.float32),
                   jax.ShapeDtypeStruct((B * P, A), jnp.float32)),
        in_specs=[pl.BlockSpec(memory_space=VMEM)] * 8,
        out_specs=(pl.BlockSpec(memory_space=VMEM),
                   pl.BlockSpec(memory_space=VMEM)),
    )(logits, params["w1"], params["b1"], params["w2"], params["b2"],
      job_types, first_job, alloc_mask)

    return idx, alloc.reshape(B, P, A)   # contiguous reshape, free inside the jit


def actor_forward(params, logits, job_types, first_job, alloc_mask, state=None):
    all_index_logits, all_allocation_logits = _actor_forward_core(
        params, logits, job_types, first_job, alloc_mask)
    return (all_index_logits, all_allocation_logits), state


# ---------------- pure-JAX reference (for correctness check) ----------------

def actor_reference(params, logits, job_types, first_job, alloc_mask):
    B, P = job_types.shape
    skip = jnp.all(job_types == -1, axis=-1)
    h = jnp.maximum(
        jnp.dot(logits, params["w1"], precision="highest") + params["b1"], 0.0)
    alloc = jnp.dot(h, params["w2"], precision="highest") + params["b2"]
    alloc = jnp.where(alloc_mask != 0, alloc, -jnp.inf).reshape(B, P, -1)
    alloc = jnp.where(skip[:, None, None], 0.0, alloc)
    idx = jnp.where(jnp.arange(P)[None, :] == first_job.reshape(B, 1), 0.0, -jnp.inf)
    idx = jnp.where(skip[:, None], 0.0, idx)
    return idx, alloc


def _close_or_equal(a, b, tol=5e-3):
    # handles exact -inf / 0.0 matches plus small fp deltas from the matmuls
    return bool(jnp.all((jnp.abs(a - b) < tol) | (a == b)))


# ---------------- main ----------------

if __name__ == "__main__":
    B, P, H, A = BATCH, PENDING_NUM, HIDDEN_DIM, ACTION_DIM
    root = jax.random.PRNGKey(0)
    keys = [jax.random.fold_in(root, i) for i in range(10)]

    # observation-derived inputs, built directly in the dtypes/shapes the kernel
    # consumes (these mirror host-side numpy obs fields; no per-call wrapper prep)
    logits = jax.random.normal(keys[0], (B * P, H), jnp.float32)          # preprocess output
    job_types = jax.random.randint(keys[1], (B, P), -1, 4, dtype=jnp.int32)  # -1 = empty slot
    job_types = job_types.at[3].set(-1)                                   # one fully-skipped batch elem
    first_job = jax.random.randint(keys[2], (B, 1), 0, P, dtype=jnp.int32)
    alloc_mask = jax.random.bernoulli(keys[3], 0.6, (B * P, A)).astype(jnp.int32)

    # parameters of self.last = Linear(H,H) -> ReLU -> Linear(H,A)
    params = {
        "w1": 0.1 * jax.random.normal(keys[4], (H, H), jnp.float32),
        "b1": 0.1 * jax.random.normal(keys[5], (1, H), jnp.float32),
        "w2": 0.1 * jax.random.normal(keys[6], (H, A), jnp.float32),
        "b2": 0.1 * jax.random.normal(keys[7], (1, A), jnp.float32),
    }

    (all_index_logits, all_allocation_logits), state = actor_forward(
        params, logits, job_types, first_job, alloc_mask)
    all_index_logits = jax.block_until_ready(all_index_logits)
    all_allocation_logits = jax.block_until_ready(all_allocation_logits)

    ref_idx, ref_alloc = actor_reference(params, logits, job_types, first_job, alloc_mask)

    ok = all_index_logits.shape == (B, P)
    ok = ok and all_allocation_logits.shape == (B, P, A)
    ok = ok and not bool(jnp.any(jnp.isnan(all_index_logits)))
    ok = ok and not bool(jnp.any(jnp.isnan(all_allocation_logits)))
    ok = ok and _close_or_equal(all_index_logits, ref_idx)
    ok = ok and _close_or_equal(all_allocation_logits, ref_alloc)

    if ok:
        print("KERNEL_OK")
</pallas_src>

<mosaic_0001>
module attributes {stable_mosaic.version = 11 : i64} {
  func.func @actor_kernel(%arg0: memref<64x32xf32, #tpu.memory_space<vmem>>, %arg1: memref<32x32xf32, #tpu.memory_space<vmem>>, %arg2: memref<1x32xf32, #tpu.memory_space<vmem>>, %arg3: memref<32x16xf32, #tpu.memory_space<vmem>>, %arg4: memref<1x16xf32, #tpu.memory_space<vmem>>, %arg5: memref<8x8xi32, #tpu.memory_space<vmem>>, %arg6: memref<8x1xi32, #tpu.memory_space<vmem>>, %arg7: memref<64x16xi32, #tpu.memory_space<vmem>>, %arg8: memref<8x8xf32, #tpu.memory_space<vmem>>, %arg9: memref<64x16xf32, #tpu.memory_space<vmem>>) attributes {dimension_semantics = [], scalar_prefetch = 0 : i64, scratch_operands = 0 : i64, tpu.core_type = #tpu.core_type<tc>} {
    %c0 = arith.constant 0 : index
    %c0_0 = arith.constant 0 : index
    %0 = vector.load %arg5[%c0, %c0_0] : memref<8x8xi32, #tpu.memory_space<vmem>>, vector<8x8xi32>
    %c-1_i32 = arith.constant -1 : i32
    %1 = vector.broadcast %c-1_i32 : i32 to vector<8x8xi32>
    %2 = arith.cmpi ne, %0, %1 : vector<8x8xi32>
    %3 = arith.extui %2 : vector<8x8xi1> to vector<8x8xi32>
    %4 = arith.sitofp %3 : vector<8x8xi32> to vector<8x8xf32>
    %cst = arith.constant dense<0.000000e+00> : vector<8xf32>
    %5 = vector.multi_reduction <add>, %4, %cst [1] : vector<8x8xf32> to vector<8xf32>
    %6 = vector.shape_cast %5 : vector<8xf32> to vector<8x1xf32>
    %cst_1 = arith.constant 0.000000e+00 : f32
    %7 = vector.broadcast %cst_1 : f32 to vector<8x1xf32>
    %8 = arith.cmpf oeq, %6, %7 : vector<8x1xf32>
    %9 = tpu.iota {dimensions = array<i32: 0>} : vector<64x8xi32>
    %10 = tpu.iota {dimensions = array<i32: 1>} : vector<64x8xi32>
    %c8_i32 = arith.constant 8 : i32
    %11 = vector.broadcast %c8_i32 : i32 to vector<64x8xi32>
    %12 = arith.muli %10, %11 : vector<64x8xi32>
    %13 = arith.cmpi sge, %9, %12 : vector<64x8xi32>
    %c1_i32 = arith.constant 1 : i32
    %14 = vector.broadcast %c1_i32 : i32 to vector<64x8xi32>
    %15 = arith.addi %10, %14 : vector<64x8xi32>
    %c8_i32_2 = arith.constant 8 : i32
    %16 = vector.broadcast %c8_i32_2 : i32 to vector<64x8xi32>
    %17 = arith.muli %15, %16 : vector<64x8xi32>
    %18 = arith.cmpi slt, %9, %17 : vector<64x8xi32>
    %19 = arith.andi %13, %18 : vector<64x8xi1>
    %20 = arith.extui %19 : vector<64x8xi1> to vector<64x8xi32>
    %21 = arith.sitofp %20 : vector<64x8xi32> to vector<64x8xf32>
    %cst_3 = arith.constant dense<0.000000e+00> : vector<64x8xf32>
    %22 = tpu.matmul %21, %4, %cst_3 {dimension_numbers = #tpu.dot_dimension_numbers<[1], [0], [0], [1], [0, 0, 1, 1], [], []>} : vector<64x8xf32>, vector<8x8xf32>, vector<64x8xf32> -> vector<64x8xf32>
    %cst_4 = arith.constant dense<0.000000e+00> : vector<64xf32>
    %23 = vector.multi_reduction <add>, %22, %cst_4 [1] : vector<64x8xf32> to vector<64xf32>
    %24 = vector.shape_cast %23 : vector<64xf32> to vector<64x1xf32>
    %cst_5 = arith.constant 0.000000e+00 : f32
    %25 = vector.broadcast %cst_5 : f32 to vector<64x1xf32>
    %26 = arith.cmpf oeq, %24, %25 : vector<64x1xf32>
    %c0_6 = arith.constant 0 : index
    %c0_7 = arith.constant 0 : index
    %27 = vector.load %arg0[%c0_6, %c0_7] : memref<64x32xf32, #tpu.memory_space<vmem>>, vector<64x32xf32>
    %c0_8 = arith.constant 0 : index
    %c0_9 = arith.constant 0 : index
    %28 = vector.load %arg1[%c0_8, %c0_9] : memref<32x32xf32, #tpu.memory_space<vmem>>, vector<32x32xf32>
    %cst_10 = arith.constant dense<0.000000e+00> : vector<64x32xf32>
    %29 = tpu.matmul %27, %28, %cst_10 {dimension_numbers = #tpu.dot_dimension_numbers<[1], [0], [0], [1], [0, 0, 1, 1], [], []>} : vector<64x32xf32>, vector<32x32xf32>, vector<64x32xf32> -> vector<64x32xf32>
    %c0_11 = arith.constant 0 : index
    %c0_12 = arith.constant 0 : index
    %30 = vector.load %arg2[%c0_11, %c0_12] : memref<1x32xf32, #tpu.memory_space<vmem>>, vector<1x32xf32>
    %31 = vector.broadcast %30 : vector<1x32xf32> to vector<64x32xf32>
    %32 = arith.addf %29, %31 : vector<64x32xf32>
    %cst_13 = arith.constant 0.000000e+00 : f32
    %33 = vector.broadcast %cst_13 : f32 to vector<64x32xf32>
    %34 = arith.maximumf %32, %33 : vector<64x32xf32>
    %c0_14 = arith.constant 0 : index
    %c0_15 = arith.constant 0 : index
    %35 = vector.load %arg3[%c0_14, %c0_15] : memref<32x16xf32, #tpu.memory_space<vmem>>, vector<32x16xf32>
    %cst_16 = arith.constant dense<0.000000e+00> : vector<64x16xf32>
    %36 = tpu.matmul %34, %35, %cst_16 {dimension_numbers = #tpu.dot_dimension_numbers<[1], [0], [0], [1], [0, 0, 1, 1], [], []>} : vector<64x32xf32>, vector<32x16xf32>, vector<64x16xf32> -> vector<64x16xf32>
    %c0_17 = arith.constant 0 : index
    %c0_18 = arith.constant 0 : index
    %37 = vector.load %arg4[%c0_17, %c0_18] : memref<1x16xf32, #tpu.memory_space<vmem>>, vector<1x16xf32>
    %38 = vector.broadcast %37 : vector<1x16xf32> to vector<64x16xf32>
    %39 = arith.addf %36, %38 : vector<64x16xf32>
    %c0_19 = arith.constant 0 : index
    %c0_20 = arith.constant 0 : index
    %40 = vector.load %arg7[%c0_19, %c0_20] : memref<64x16xi32, #tpu.memory_space<vmem>>, vector<64x16xi32>
    %c0_i32 = arith.constant 0 : i32
    %41 = vector.broadcast %c0_i32 : i32 to vector<64x16xi32>
    %42 = arith.cmpi ne, %40, %41 : vector<64x16xi32>
    %cst_21 = arith.constant dense<true> : vector<64x1xi1>
    %43 = arith.xori %26, %cst_21 : vector<64x1xi1>
    %44 = vector.broadcast %43 : vector<64x1xi1> to vector<64x16xi1>
    %45 = arith.andi %42, %44 : vector<64x16xi1>
    %cst_22 = arith.constant 0.000000e+00 : f32
    %cst_23 = arith.constant 0xFF800000 : f32
    %46 = vector.broadcast %cst_22 : f32 to vector<64x1xf32>
    %47 = vector.broadcast %cst_23 : f32 to vector<64x1xf32>
    %48 = arith.select %26, %46, %47 : vector<64x1xi1>, vector<64x1xf32>
    %49 = vector.shape_cast %48 : vector<64x1xf32> to vector<64x1xf32>
    %50 = vector.broadcast %49 : vector<64x1xf32> to vector<64x16xf32>
    %51 = arith.select %45, %39, %50 : vector<64x16xi1>, vector<64x16xf32>
    %c0_24 = arith.constant 0 : index
    %c0_25 = arith.constant 0 : index
    %52 = vector.load %arg9[%c0_24, %c0_25] : memref<64x16xf32, #tpu.memory_space<vmem>>, vector<64x16xf32>
    tpu.vector_store %arg9[%c0_24, %c0_25], %51 {strides = array<i32>} : memref<64x16xf32, #tpu.memory_space<vmem>>, vector<64x16xf32>,
    %53 = tpu.iota {dimensions = array<i32: 1>} : vector<8x8xi32>
    %c0_26 = arith.constant 0 : index
    %c0_27 = arith.constant 0 : index
    %54 = vector.load %arg6[%c0_26, %c0_27] : memref<8x1xi32, #tpu.memory_space<vmem>>, vector<8x1xi32>
    %55 = vector.broadcast %54 : vector<8x1xi32> to vector<8x8xi32>
    %56 = arith.cmpi eq, %53, %55 : vector<8x8xi32>
    %57 = vector.broadcast %8 : vector<8x1xi1> to vector<8x8xi1>
    %58 = arith.ori %56, %57 : vector<8x8xi1>
    %cst_28 = arith.constant 0.000000e+00 : f32
    %cst_29 = arith.constant 0xFF800000 : f32
    %59 = vector.broadcast %cst_28 : f32 to vector<8x8xf32>
    %60 = vector.broadcast %cst_29 : f32 to vector<8x8xf32>
    %61 = arith.select %58, %59, %60 : vector<8x8xi1>, vector<8x8xf32>
    %c0_30 = arith.constant 0 : index
    %c0_31 = arith.constant 0 : index
    %62 = vector.load %arg8[%c0_30, %c0_31] : memref<8x8xf32, #tpu.memory_space<vmem>>, vector<8x8xf32>
    tpu.vector_store %arg8[%c0_30, %c0_31], %61 {strides = array<i32>} : memref<8x8xf32, #tpu.memory_space<vmem>>, vector<8x8xf32>,
    return
  }
}

</mosaic_0001>

<llo_original>
// kernel: _actor_forward_core.1
$region0: #{_actor_forward_core.1}
  #allocation0 [shape = 'u32[]', space=smem, size = 0x4, offset = 0x4, fixed_abs, tag = 'smem constant byte address 0x4 - core index']
  #allocation1 [shape = 'u32[144,128]{1,0:T(1,128)}', space=vmem, size = 0x12000, scoped, tag = 'internal scratch']
  %s0 = inlined_call_operand.vmem [shape: f32[64,32], index: 0, kind: input, shape index: {}]
  %s1 = inlined_call_operand.vmem [shape: f32[32,32], index: 1, kind: input, shape index: {}]
  %s2 = inlined_call_operand.vmem [shape: f32[1,32], index: 2, kind: input, shape index: {}]
  %s3 = inlined_call_operand.vmem [shape: f32[32,16], index: 3, kind: input, shape index: {}]
  %s4 = inlined_call_operand.vmem [shape: f32[1,16], index: 4, kind: input, shape index: {}]
  %s5 = inlined_call_operand.vmem [shape: s32[8,8], index: 5, kind: input, shape index: {}]
  %s6 = inlined_call_operand.vmem [shape: s32[8,1], index: 6, kind: input, shape index: {}]
  %s7 = inlined_call_operand.vmem [shape: s32[64,16], index: 7, kind: input, shape index: {}]
  %s8 = inlined_call_operand.hbm [shape: f32[8,8], index: 8, kind: output, shape index: {0}]
  %s9 = inlined_call_operand.hbm [shape: f32[64,16], index: 9, kind: output, shape index: {1}]
  %10 = xla_tuple %s8, %s9
  %s11 = sld [smem:[#allocation0]]
  $region50: #{_actor_forward_core.1} parent=0
    _
  %s13 = ssub.s32 1, %s11
  %s14 = scalar_select 0, %s13, %s11
  $region1: #{_actor_forward_core.1} parent=0
    #allocation2 [shape = 'u8[4096]{0}', space=vmem, size = 0x1000, scoped, tag = 'output window, operand 0, single buffered']
    #allocation3 [shape = 's32[1]{0}', space=sflag, size = 0x4, scoped, tag = 'scoped memory for _actor_forward_core.1']
    #allocation4 [shape = 'u8[32768]{0}', space=vmem, size = 0x8000, scoped, tag = 'output window, operand 1, single buffered']
    #allocation5 [shape = 's32[1]{0}', space=sflag, size = 0x4, scoped, tag = 'scoped memory for _actor_forward_core.1']
    %15 = vsyncpa [#allocation3], 0
    %16 = vsyncpa [#allocation5], 0
    // Predicated region
    $region2: #{_actor_forward_core.1} parent=1 // pred_check
      _
    $region3: #{_actor_forward_core.1} parent=1 // pred_check_branch
      %18 = sbr.rel (0) target = $region5
    $region4: #{_actor_forward_core.1} parent=1 // pred_region
      _
    $region5: #{_actor_forward_core.1} parent=1 // pred_fallthru
      _
    // Predicated region
    $region6: #{_actor_forward_core.1} parent=1 // pred_check
      _
    $region7: #{_actor_forward_core.1} parent=1 // pred_check_branch
      %20 = sbr.rel (0) target = $region9
    $region8: #{_actor_forward_core.1} parent=1 // pred_region
      _
    $region9: #{_actor_forward_core.1} parent=1 // pred_fallthru
      _
    // Predicated region
    $region10: #{_actor_forward_core.1} parent=1 // pred_check
      _
    $region11: #{_actor_forward_core.1} parent=1 // pred_check_branch
      %22 = sbr.rel (0) target = $region13
    $region12: #{_actor_forward_core.1} parent=1 // pred_region
      _
    $region13: #{_actor_forward_core.1} parent=1 // pred_fallthru
      _
    // Predicated region
    $region14: #{_actor_forward_core.1} parent=1 // pred_check
      _
    $region15: #{_actor_forward_core.1} parent=1 // pred_check_branch
      %24 = sbr.rel (0) target = $region17
    $region16: #{_actor_forward_core.1} parent=1 // pred_region
      _
    $region17: #{_actor_forward_core.1} parent=1 // pred_fallthru
      _
    // Predicated region
    $region18: #{_actor_forward_core.1} parent=1 // pred_check
      _
    $region19: #{_actor_forward_core.1} parent=1 // pred_check_branch
      %26 = sbr.rel (0) target = $region21
    $region20: #{_actor_forward_core.1} parent=1 // pred_region
      _
    $region21: #{_actor_forward_core.1} parent=1 // pred_fallthru
      _
    // Predicated region
    $region22: #{_actor_forward_core.1} parent=1 // pred_check
      _
    $region23: #{_actor_forward_core.1} parent=1 // pred_check_branch
      %28 = sbr.rel (0) target = $region25
    $region24: #{_actor_forward_core.1} parent=1 // pred_region
      _
    $region25: #{_actor_forward_core.1} parent=1 // pred_fallthru
      _
    // Predicated region
    $region26: #{_actor_forward_core.1} parent=1 // pred_check
      _
    $region27: #{_actor_forward_core.1} parent=1 // pred_check_branch
      %30 = sbr.rel (0) target = $region29
    $region28: #{_actor_forward_core.1} parent=1 // pred_region
      _
    $region29: #{_actor_forward_core.1} parent=1 // pred_fallthru
      _
    // Predicated region
    $region30: #{_actor_forward_core.1} parent=1 // pred_check
      _
    $region31: #{_actor_forward_core.1} parent=1 // pred_check_branch
      %32 = sbr.rel (0) target = $region33
    $region32: #{_actor_forward_core.1} parent=1 // pred_region
      _
    $region33: #{_actor_forward_core.1} parent=1 // pred_fallthru
      _
    %v33 = vld [vmem:[%s5] sm:$0xff]
    %vm34 = vcmp.ne.s32.totalorder %v33, 4294967295
    %v35 = vsel %vm34, 1, 0
    %v36 = vcvt.s32.f32 %v35
    %vm37 = vcmask 64512
    %v38 = vsel %vm37, %v36, 0.0
    %39 = vadd.xlane.f32.xlu0 %v38
    %v40 = vpop.xlane.xlu0 %39
    %vm41 = vcmp.eq.f32.partialorder %v40, 0.0
    %v42 = vlaneseq
    %v43 = vshrl.u32 %v42, 7
    %v44 = vadd.s32 %v43, 8
    %v45 = vadd.s32 %v43, 16
    %v46 = vadd.s32 %v43, 24
    %v47 = vadd.s32 %v43, 32
    %v48 = vadd.s32 %v43, 40
    %v49 = vadd.s32 %v43, 48
    %v50 = vadd.s32 %v43, 56
    %v51 = vlaneseq
    %v52 = vand.u32 %v51, 127
    %v53 = vmul.u32 %v52, 8
    %vm54 = vcmp.ge.s32.totalorder %v43, %v53
    %vm55 = vcmp.ge.s32.totalorder %v44, %v53
    %vm56 = vcmp.ge.s32.totalorder %v45, %v53
    %vm57 = vcmp.ge.s32.totalorder %v46, %v53
    %vm58 = vcmp.ge.s32.totalorder %v47, %v53
    %vm59 = vcmp.ge.s32.totalorder %v48, %v53
    %vm60 = vcmp.ge.s32.totalorder %v49, %v53
    %vm61 = vcmp.ge.s32.totalorder %v50, %v53
    %v62 = vadd.s32 %v52, 1
    %v63 = vmul.u32 %v62, 8
    %vm64 = vcmp.lt.s32.totalorder %v43, %v63
    %vm65 = vcmp.lt.s32.totalorder %v44, %v63
    %vm66 = vcmp.lt.s32.totalorder %v45, %v63
    %vm67 = vcmp.lt.s32.totalorder %v46, %v63
    %vm68 = vcmp.lt.s32.totalorder %v47, %v63
    %vm69 = vcmp.lt.s32.totalorder %v48, %v63
    %vm70 = vcmp.lt.s32.totalorder %v49, %v63
    %vm71 = vcmp.lt.s32.totalorder %v50, %v63
    %vm72 = vmand %vm54, %vm64
    %vm73 = vmand %vm55, %vm65
    %vm74 = vmand %vm56, %vm66
    %vm75 = vmand %vm57, %vm67
    %vm76 = vmand %vm58, %vm68
    %vm77 = vmand %vm59, %vm69
    %vm78 = vmand %vm60, %vm70
    %vm79 = vmand %vm61, %vm71
    %v80 = vsel %vm72, 1, 0
    %v81 = vsel %vm73, 1, 0
    %v82 = vsel %vm74, 1, 0
    %v83 = vsel %vm75, 1, 0
    %v84 = vsel %vm76, 1, 0
    %v85 = vsel %vm77, 1, 0
    %v86 = vsel %vm78, 1, 0
    %v87 = vsel %vm79, 1, 0
    %v88 = vcvt.s32.f32 %v80
    %v89 = vcvt.s32.f32 %v81
    %v90 = vcvt.s32.f32 %v82
    %v91 = vcvt.s32.f32 %v83
    %v92 = vcvt.s32.f32 %v84
    %v93 = vcvt.s32.f32 %v85
    %v94 = vcvt.s32.f32 %v86
    %v95 = vcvt.s32.f32 %v87
    %v97 = vsel %vm37, %v88, 0
    %v100 = vsel %vm37, %v89, 0
    %v103 = vsel %vm37, %v90, 0
    %v106 = vsel %vm37, %v91, 0
    %v109 = vsel %vm37, %v92, 0
    %v112 = vsel %vm37, %v93, 0
    %v115 = vsel %vm37, %v94, 0
    %v118 = vsel %vm37, %v95, 0
    %120 = vmatprep.subr.mxu0 0.0
    %121 = vmatpush1.msra.mxu0 0.0
    %122 = vmatprep.subr.mxu0 0.0
    %123 = vmatpush1.msra.mxu0 0.0
    %124 = vmatprep.subr.mxu0 0.0
    %125 = vmatpush1.msra.mxu0 0.0
    %126 = vmatprep.subr.mxu0 0.0
    %127 = vmatpush1.msra.mxu0 0.0
    %128 = vmatprep.subr.mxu0 0.0
    %129 = vmatpush1.msra.mxu0 0.0
    %130 = vmatprep.subr.mxu0 0.0
    %131 = vmatpush1.msra.mxu0 0.0
    %132 = vmatprep.subr.mxu0 0.0
    %133 = vmatpush1.msra.mxu0 0.0
    %134 = vmatprep.subr.mxu0 0.0
    %135 = vmatpush1.msra.mxu0 0.0
    %136 = vmatprep.subr.mxu0 0.0
    %137 = vmatpush1.msra.mxu0 0.0
    %138 = vmatprep.subr.mxu0 0.0
    %139 = vmatpush1.msra.mxu0 0.0
    %140 = vmatprep.subr.mxu0 0.0
    %141 = vmatpush1.msra.mxu0 0.0
    %142 = vmatprep.subr.mxu0 0.0
    %143 = vmatpush1.msra.mxu0 0.0
    %144 = vmatprep.subr.mxu0 0.0
    %145 = vmatpush1.msra.mxu0 0.0
    %146 = vmatprep.subr.mxu0 0.0
    %147 = vmatpush1.msra.mxu0 0.0
    %148 = vmatprep.subr.mxu0 0.0
    %149 = vmatpush1.msra.mxu0 0.0
    %150 = vmatprep.subr.mxu0 0.0
    %151 = vmatpush1.msra.mxu0 %v36
    %152 = vmatprep.subr.mxu0 0.0
    %153 = vmatpush2.msra.mxu0 0.0
    %154 = vmatprep.subr.mxu0 0.0
    %155 = vmatpush2.msra.mxu0 0.0
    %156 = vmatprep.subr.mxu0 0.0
    %157 = vmatpush2.msra.mxu0 0.0
    %158 = vmatprep.subr.mxu0 0.0
    %159 = vmatpush2.msra.mxu0 0.0
    %160 = vmatprep.subr.mxu0 0.0
    %161 = vmatpush2.msra.mxu0 0.0
    %162 = vmatprep.subr.mxu0 0.0
    %163 = vmatpush2.msra.mxu0 0.0
    %164 = vmatprep.subr.mxu0 0.0
    %165 = vmatpush2.msra.mxu0 0.0
    %166 = vmatprep.subr.mxu0 0.0
    %167 = vmatpush2.msra.mxu0 0.0
    %168 = vmatprep.subr.mxu0 0.0
    %169 = vmatpush2.msra.mxu0 0.0
    %170 = vmatprep.subr.mxu0 0.0
    %171 = vmatpush2.msra.mxu0 0.0
    %172 = vmatprep.subr.mxu0 0.0
    %173 = vmatpush2.msra.mxu0 0.0
    %174 = vmatprep.subr.mxu0 0.0
    %175 = vmatpush2.msra.mxu0 0.0
    %176 = vmatprep.subr.mxu0 0.0
    %177 = vmatpush2.msra.mxu0 0.0
    %178 = vmatprep.subr.mxu0 0.0
    %179 = vmatpush2.msra.mxu0 0.0
    %180 = vmatprep.subr.mxu0 0.0
    %181 = vmatpush2.msra.mxu0 0.0
    %182 = vmatprep.subr.mxu0 0.0
    %183 = vmatpush2.msra.mxu0 0.0
    %184 = vmatprep.mubr.f32.mxu0 0.0
    %185 = vmatmul.mubr.f32.gmra.mxu0 %v97
    %v186 = vpop.f32.mrf.mxu0
    %v187 = vadd.f32 0.0, %v186
    %v188 = vpop.f32.mrf.mxu0
    %189 = vmatprep.mubr.f32.mxu0 0.0
    %190 = vmatmul.mubr.f32.gmra.mxu0 %v100
    %v191 = vpop.f32.mrf.mxu0
    %v192 = vadd.f32 0.0, %v191
    %v193 = vpop.f32.mrf.mxu0
    %194 = vmatprep.mubr.f32.mxu0 0.0
    %195 = vmatmul.mubr.f32.gmra.mxu0 %v103
    %v196 = vpop.f32.mrf.mxu0
    %v197 = vadd.f32 0.0, %v196
    %v198 = vpop.f32.mrf.mxu0
    %199 = vmatprep.mubr.f32.mxu0 0.0
    %200 = vmatmul.mubr.f32.gmra.mxu0 %v106
    %v201 = vpop.f32.mrf.mxu0
    %v202 = vadd.f32 0.0, %v201
    %v203 = vpop.f32.mrf.mxu0
    %204 = vmatprep.mubr.f32.mxu0 0.0
    %205 = vmatmul.mubr.f32.gmra.mxu0 %v109
    %v206 = vpop.f32.mrf.mxu0
    %v207 = vadd.f32 0.0, %v206
    %v208 = vpop.f32.mrf.mxu0
    %209 = vmatprep.mubr.f32.mxu0 0.0
    %210 = vmatmul.mubr.f32.gmra.mxu0 %v112
    %v211 = vpop.f32.mrf.mxu0
    %v212 = vadd.f32 0.0, %v211
    %v213 = vpop.f32.mrf.mxu0
    %214 = vmatprep.mubr.f32.mxu0 0.0
    %215 = vmatmul.mubr.f32.gmra.mxu0 %v115
    %v216 = vpop.f32.mrf.mxu0
    %v217 = vadd.f32 0.0, %v216
    %v218 = vpop.f32.mrf.mxu0
    %219 = vmatprep.mubr.f32.mxu0 0.0
    %220 = vmatmul.mubr.f32.gmra.mxu0 %v118
    %v221 = vpop.f32.mrf.mxu0
    %v222 = vadd.f32 0.0, %v221
    %v223 = vpop.f32.mrf.mxu0
    %224 = vdwg.mxu0
    %v225 = vsel %vm37, %v187, 0.0
    %226 = vadd.xlane.f32.xlu0 %v225
    %v227 = vpop.xlane.xlu0 %226
    %v228 = vsel %vm37, %v192, 0.0
    %229 = vadd.xlane.f32.xlu0 %v228
    %v230 = vpop.xlane.xlu0 %229
    %v231 = vsel %vm37, %v197, 0.0
    %232 = vadd.xlane.f32.xlu0 %v231
    %v233 = vpop.xlane.xlu0 %232
    %v234 = vsel %vm37, %v202, 0.0
    %235 = vadd.xlane.f32.xlu0 %v234
    %v236 = vpop.xlane.xlu0 %235
    %v237 = vsel %vm37, %v207, 0.0
    %238 = vadd.xlane.f32.xlu0 %v237
    %v239 = vpop.xlane.xlu0 %238
    %v240 = vsel %vm37, %v212, 0.0
    %241 = vadd.xlane.f32.xlu0 %v240
    %v242 = vpop.xlane.xlu0 %241
    %v243 = vsel %vm37, %v217, 0.0
    %244 = vadd.xlane.f32.xlu0 %v243
    %v245 = vpop.xlane.xlu0 %244
    %v246 = vsel %vm37, %v222, 0.0
    %247 = vadd.xlane.f32.xlu0 %v246
    %v248 = vpop.xlane.xlu0 %247
    %vm249 = vcmp.eq.f32.partialorder %v227, 0.0
    %vm250 = vcmp.eq.f32.partialorder %v230, 0.0
    %vm251 = vcmp.eq.f32.partialorder %v233, 0.0
    %vm252 = vcmp.eq.f32.partialorder %v236, 0.0
    %vm253 = vcmp.eq.f32.partialorder %v239, 0.0
    %vm254 = vcmp.eq.f32.partialorder %v242, 0.0
    %vm255 = vcmp.eq.f32.partialorder %v245, 0.0
    %vm256 = vcmp.eq.f32.partialorder %v248, 0.0
    %v257 = vld [vmem:[%s0] sm:$0xff]
    %v258 = vld [vmem:[%s0 + $0x8] sm:$0xff]
    %v259 = vld [vmem:[%s0 + $0x10] sm:$0xff]
    %v260 = vld [vmem:[%s0 + $0x18] sm:$0xff]
    %v261 = vld [vmem:[%s0 + $0x20] sm:$0xff]
    %v262 = vld [vmem:[%s0 + $0x28] sm:$0xff]
    %v263 = vld [vmem:[%s0 + $0x30] sm:$0xff]
    %v264 = vld [vmem:[%s0 + $0x38] sm:$0xff]
    %v265 = vld [vmem:[%s1] sm:$0xff]
    %v266 = vld [vmem:[%s1 + $0x8] sm:$0xff]
    %v267 = vld [vmem:[%s1 + $0x10] sm:$0xff]
    %v268 = vld [vmem:[%s1 + $0x18] sm:$0xff]
    %v269 = vld [vmem:[%s2] sm:$0x1]
    %v271 = vlaneseq
    %v272 = vshrl.u32 %v271, 7
    %v273 = vsub.s32 0, %v272
    %v274 = vrot.slane %v269, %v273
    %vm276 = vcmask 261120
    %v278 = vsel %vm276, %v257, 0
    %v281 = vsel %vm276, %v258, 0
    %v284 = vsel %vm276, %v259, 0
    %v287 = vsel %vm276, %v260, 0
    %v290 = vsel %vm276, %v261, 0
    %v293 = vsel %vm276, %v262, 0
    %v296 = vsel %vm276, %v263, 0
    %v299 = vsel %vm276, %v264, 0
    %301 = vmatprep.subr.mxu0 0.0
    %302 = vmatpush1.msra.mxu0 0.0
    %303 = vmatprep.subr.mxu0 0.0
    %304 = vmatpush1.msra.mxu0 0.0
    %305 = vmatprep.subr.mxu0 0.0
    %306 = vmatpush1.msra.mxu0 0.0
    %307 = vmatprep.subr.mxu0 0.0
    %308 = vmatpush1.msra.mxu0 0.0
    %309 = vmatprep.subr.mxu0 0.0
    %310 = vmatpush1.msra.mxu0 0.0
    %311 = vmatprep.subr.mxu0 0.0
    %312 = vmatpush1.msra.mxu0 0.0
    %313 = vmatprep.subr.mxu0 0.0
    %314 = vmatpush1.msra.mxu0 0.0
    %315 = vmatprep.subr.mxu0 0.0
    %316 = vmatpush1.msra.mxu0 0.0
    %317 = vmatprep.subr.mxu0 0.0
    %318 = vmatpush1.msra.mxu0 0.0
    %319 = vmatprep.subr.mxu0 0.0
    %320 = vmatpush1.msra.mxu0 0.0
    %321 = vmatprep.subr.mxu0 0.0
    %322 = vmatpush1.msra.mxu0 0.0
    %323 = vmatprep.subr.mxu0 0.0
    %324 = vmatpush1.msra.mxu0 0.0
    %325 = vmatprep.subr.mxu0 0.0
    %326 = vmatpush1.msra.mxu0 %v268
    %327 = vmatprep.subr.mxu0 0.0
    %328 = vmatpush1.msra.mxu0 %v267
    %329 = vmatprep.subr.mxu0 0.0
    %330 = vmatpush1.msra.mxu0 %v266
    %331 = vmatprep.subr.mxu0 0.0
    %332 = vmatpush1.msra.mxu0 %v265
    %333 = vmatprep.subr.mxu0 0.0
    %334 = vmatpush2.msra.mxu0 0.0
    %335 = vmatprep.subr.mxu0 0.0
    %336 = vmatpush2.msra.mxu0 0.0
    %337 = vmatprep.subr.mxu0 0.0
    %338 = vmatpush2.msra.mxu0 0.0
    %339 = vmatprep.subr.mxu0 0.0
    %340 = vmatpush2.msra.mxu0 0.0
    %341 = vmatprep.subr.mxu0 0.0
    %342 = vmatpush2.msra.mxu0 0.0
    %343 = vmatprep.subr.mxu0 0.0
    %344 = vmatpush2.msra.mxu0 0.0
    %345 = vmatprep.subr.mxu0 0.0
    %346 = vmatpush2.msra.mxu0 0.0
    %347 = vmatprep.subr.mxu0 0.0
    %348 = vmatpush2.msra.mxu0 0.0
    %349 = vmatprep.subr.mxu0 0.0
    %350 = vmatpush2.msra.mxu0 0.0
    %351 = vmatprep.subr.mxu0 0.0
    %352 = vmatpush2.msra.mxu0 0.0
    %353 = vmatprep.subr.mxu0 0.0
    %354 = vmatpush2.msra.mxu0 0.0
    %355 = vmatprep.subr.mxu0 0.0
    %356 = vmatpush2.msra.mxu0 0.0
    %357 = vmatprep.subr.mxu0 0.0
    %358 = vmatpush2.msra.mxu0 0.0
    %359 = vmatprep.subr.mxu0 0.0
    %360 = vmatpush2.msra.mxu0 0.0
    %361 = vmatprep.subr.mxu0 0.0
    %362 = vmatpush2.msra.mxu0 0.0
    %363 = vmatprep.subr.mxu0 0.0
    %364 = vmatpush2.msra.mxu0 0.0
    %365 = vmatprep.mubr.f32.mxu0 0.0
    %366 = vmatmul.mubr.f32.gmra.mxu0 %v278
    %v367 = vpop.f32.mrf.mxu0
    %v368 = vadd.f32 %v274, %v367
    %v369 = vpop.f32.mrf.mxu0
    %370 = vmatprep.mubr.f32.mxu0 0.0
    %371 = vmatmul.mubr.f32.gmra.mxu0 %v281
    %v372 = vpop.f32.mrf.mxu0
    %v373 = vadd.f32 %v274, %v372
    %v374 = vpop.f32.mrf.mxu0
    %375 = vmatprep.mubr.f32.mxu0 0.0
    %376 = vmatmul.mubr.f32.gmra.mxu0 %v284
    %v377 = vpop.f32.mrf.mxu0
    %v378 = vadd.f32 %v274, %v377
    %v379 = vpop.f32.mrf.mxu0
    %380 = vmatprep.mubr.f32.mxu0 0.0
    %381 = vmatmul.mubr.f32.gmra.mxu0 %v287
    %v382 = vpop.f32.mrf.mxu0
    %v383 = vadd.f32 %v274, %v382
    %v384 = vpop.f32.mrf.mxu0
    %385 = vmatprep.mubr.f32.mxu0 0.0
    %386 = vmatmul.mubr.f32.gmra.mxu0 %v290
    %v387 = vpop.f32.mrf.mxu0
    %v388 = vadd.f32 %v274, %v387
    %v389 = vpop.f32.mrf.mxu0
    %390 = vmatprep.mubr.f32.mxu0 0.0
    %391 = vmatmul.mubr.f32.gmra.mxu0 %v293
    %v392 = vpop.f32.mrf.mxu0
    %v393 = vadd.f32 %v274, %v392
    %v394 = vpop.f32.mrf.mxu0
    %395 = vmatprep.mubr.f32.mxu0 0.0
    %396 = vmatmul.mubr.f32.gmra.mxu0 %v296
    %v397 = vpop.f32.mrf.mxu0
    %v398 = vadd.f32 %v274, %v397
    %v399 = vpop.f32.mrf.mxu0
    %400 = vmatprep.mubr.f32.mxu0 0.0
    %401 = vmatmul.mubr.f32.gmra.mxu0 %v299
    %v402 = vpop.f32.mrf.mxu0
    %v403 = vadd.f32 %v274, %v402
    %v404 = vpop.f32.mrf.mxu0
    %405 = vdwg.mxu0
    %v406 = vmax.f32 %v368, 0.0
    %v407 = vmax.f32 %v373, 0.0
    %v408 = vmax.f32 %v378, 0.0
    %v409 = vmax.f32 %v383, 0.0
    %v410 = vmax.f32 %v388, 0.0
    %v411 = vmax.f32 %v393, 0.0
    %v412 = vmax.f32 %v398, 0.0
    %v413 = vmax.f32 %v403, 0.0
    %v414 = vld [vmem:[%s3] sm:$0xff]
    %v415 = vld [vmem:[%s3 + $0x8] sm:$0xff]
    %v416 = vld [vmem:[%s3 + $0x10] sm:$0xff]
    %v417 = vld [vmem:[%s3 + $0x18] sm:$0xff]
    %v418 = vld [vmem:[%s4] sm:$0x1]
    %v420 = vlaneseq
    %v421 = vshrl.u32 %v420, 7
    %v422 = vsub.s32 0, %v421
    %v423 = vrot.slane %v418, %v422
    %v426 = vsel %vm276, %v406, 0
    %v429 = vsel %vm276, %v407, 0
    %v432 = vsel %vm276, %v408, 0
    %v435 = vsel %vm276, %v409, 0
    %v438 = vsel %vm276, %v410, 0
    %v441 = vsel %vm276, %v411, 0
    %v444 = vsel %vm276, %v412, 0
    %v447 = vsel %vm276, %v413, 0
    %449 = vmatprep.subr.mxu0 0.0
    %450 = vmatpush1.msra.mxu0 0.0
    %451 = vmatprep.subr.mxu0 0.0
    %452 = vmatpush1.msra.mxu0 0.0
    %453 = vmatprep.subr.mxu0 0.0
    %454 = vmatpush1.msra.mxu0 0.0
    %455 = vmatprep.subr.mxu0 0.0
    %456 = vmatpush1.msra.mxu0 0.0
    %457 = vmatprep.subr.mxu0 0.0
    %458 = vmatpush1.msra.mxu0 0.0
    %459 = vmatprep.subr.mxu0 0.0
    %460 = vmatpush1.msra.mxu0 0.0
    %461 = vmatprep.subr.mxu0 0.0
    %462 = vmatpush1.msra.mxu0 0.0
    %463 = vmatprep.subr.mxu0 0.0
    %464 = vmatpush1.msra.mxu0 0.0
    %465 = vmatprep.subr.mxu0 0.0
    %466 = vmatpush1.msra.mxu0 0.0
    %467 = vmatprep.subr.mxu0 0.0
    %468 = vmatpush1.msra.mxu0 0.0
    %469 = vmatprep.subr.mxu0 0.0
    %470 = vmatpush1.msra.mxu0 0.0
    %471 = vmatprep.subr.mxu0 0.0
    %472 = vmatpush1.msra.mxu0 0.0
    %473 = vmatprep.subr.mxu0 0.0
    %474 = vmatpush1.msra.mxu0 %v417
    %475 = vmatprep.subr.mxu0 0.0
    %476 = vmatpush1.msra.mxu0 %v416
    %477 = vmatprep.subr.mxu0 0.0
    %478 = vmatpush1.msra.mxu0 %v415
    %479 = vmatprep.subr.mxu0 0.0
    %480 = vmatpush1.msra.mxu0 %v414
    %481 = vmatprep.subr.mxu0 0.0
    %482 = vmatpush2.msra.mxu0 0.0
    %483 = vmatprep.subr.mxu0 0.0
    %484 = vmatpush2.msra.mxu0 0.0
    %485 = vmatprep.subr.mxu0 0.0
    %486 = vmatpush2.msra.mxu0 0.0
    %487 = vmatprep.subr.mxu0 0.0
    %488 = vmatpush2.msra.mxu0 0.0
    %489 = vmatprep.subr.mxu0 0.0
    %490 = vmatpush2.msra.mxu0 0.0
    %491 = vmatprep.subr.mxu0 0.0
    %492 = vmatpush2.msra.mxu0 0.0
    %493 = vmatprep.subr.mxu0 0.0
    %494 = vmatpush2.msra.mxu0 0.0
    %495 = vmatprep.subr.mxu0 0.0
    %496 = vmatpush2.msra.mxu0 0.0
    %497 = vmatprep.subr.mxu0 0.0
    %498 = vmatpush2.msra.mxu0 0.0
    %499 = vmatprep.subr.mxu0 0.0
    %500 = vmatpush2.msra.mxu0 0.0
    %501 = vmatprep.subr.mxu0 0.0
    %502 = vmatpush2.msra.mxu0 0.0
    %503 = vmatprep.subr.mxu0 0.0
    %504 = vmatpush2.msra.mxu0 0.0
    %505 = vmatprep.subr.mxu0 0.0
    %506 = vmatpush2.msra.mxu0 0.0
    %507 = vmatprep.subr.mxu0 0.0
    %508 = vmatpush2.msra.mxu0 0.0
    %509 = vmatprep.subr.mxu0 0.0
    %510 = vmatpush2.msra.mxu0 0.0
    %511 = vmatprep.subr.mxu0 0.0
    %512 = vmatpush2.msra.mxu0 0.0
    %513 = vmatprep.mubr.f32.mxu0 0.0
    %514 = vmatmul.mubr.f32.gmra.mxu0 %v426
    %v515 = vpop.f32.mrf.mxu0
    %v516 = vadd.f32 %v423, %v515
    %v517 = vpop.f32.mrf.mxu0
    %518 = vmatprep.mubr.f32.mxu0 0.0
    %519 = vmatmul.mubr.f32.gmra.mxu0 %v429
    %v520 = vpop.f32.mrf.mxu0
    %v521 = vadd.f32 %v423, %v520
    %v522 = vpop.f32.mrf.mxu0
    %523 = vmatprep.mubr.f32.mxu0 0.0
    %524 = vmatmul.mubr.f32.gmra.mxu0 %v432
    %v525 = vpop.f32.mrf.mxu0
    %v526 = vadd.f32 %v423, %v525
    %v527 = vpop.f32.mrf.mxu0
    %528 = vmatprep.mubr.f32.mxu0 0.0
    %529 = vmatmul.mubr.f32.gmra.mxu0 %v435
    %v530 = vpop.f32.mrf.mxu0
    %v531 = vadd.f32 %v423, %v530
    %v532 = vpop.f32.mrf.mxu0
    %533 = vmatprep.mubr.f32.mxu0 0.0
    %534 = vmatmul.mubr.f32.gmra.mxu0 %v438
    %v535 = vpop.f32.mrf.mxu0
    %v536 = vadd.f32 %v423, %v535
    %v537 = vpop.f32.mrf.mxu0
    %538 = vmatprep.mubr.f32.mxu0 0.0
    %539 = vmatmul.mubr.f32.gmra.mxu0 %v441
    %v540 = vpop.f32.mrf.mxu0
    %v541 = vadd.f32 %v423, %v540
    %v542 = vpop.f32.mrf.mxu0
    %543 = vmatprep.mubr.f32.mxu0 0.0
    %544 = vmatmul.mubr.f32.gmra.mxu0 %v444
    %v545 = vpop.f32.mrf.mxu0
    %v546 = vadd.f32 %v423, %v545
    %v547 = vpop.f32.mrf.mxu0
    %548 = vmatprep.mubr.f32.mxu0 0.0
    %549 = vmatmul.mubr.f32.gmra.mxu0 %v447
    %v550 = vpop.f32.mrf.mxu0
    %v551 = vadd.f32 %v423, %v550
    %v552 = vpop.f32.mrf.mxu0
    %553 = vdwg.mxu0
    %v554 = vld [vmem:[%s7] sm:$0xff]
    %v555 = vld [vmem:[%s7 + $0x8] sm:$0xff]
    %v556 = vld [vmem:[%s7 + $0x10] sm:$0xff]
    %v557 = vld [vmem:[%s7 + $0x18] sm:$0xff]
    %v558 = vld [vmem:[%s7 + $0x20] sm:$0xff]
    %v559 = vld [vmem:[%s7 + $0x28] sm:$0xff]
    %v560 = vld [vmem:[%s7 + $0x30] sm:$0xff]
    %v561 = vld [vmem:[%s7 + $0x38] sm:$0xff]
    %vm562 = vcmp.ne.s32.totalorder %v554, 0
    %vm563 = vcmp.ne.s32.totalorder %v555, 0
    %vm564 = vcmp.ne.s32.totalorder %v556, 0
    %vm565 = vcmp.ne.s32.totalorder %v557, 0
    %vm566 = vcmp.ne.s32.totalorder %v558, 0
    %vm567 = vcmp.ne.s32.totalorder %v559, 0
    %vm568 = vcmp.ne.s32.totalorder %v560, 0
    %vm569 = vcmp.ne.s32.totalorder %v561, 0
    %vm570 = vmxor %vm249, 1
    %vm571 = vmxor %vm250, 1
    %vm572 = vmxor %vm251, 1
    %vm573 = vmxor %vm252, 1
    %vm574 = vmxor %vm253, 1
    %vm575 = vmxor %vm254, 1
    %vm576 = vmxor %vm255, 1
    %vm577 = vmxor %vm256, 1
    %v578 = vsel %vm570, 1, 0
    %v579 = vsel %vm571, 1, 0
    %v580 = vsel %vm572, 1, 0
    %v581 = vsel %vm573, 1, 0
    %v582 = vsel %vm574, 1, 0
    %v583 = vsel %vm575, 1, 0
    %v584 = vsel %vm576, 1, 0
    %v585 = vsel %vm577, 1, 0
    %vm586 = vcmp.eq.s32.totalorder %v578, 1
    %vm587 = vcmp.eq.s32.totalorder %v579, 1
    %vm588 = vcmp.eq.s32.totalorder %v580, 1
    %vm589 = vcmp.eq.s32.totalorder %v581, 1
    %vm590 = vcmp.eq.s32.totalorder %v582, 1
    %vm591 = vcmp.eq.s32.totalorder %v583, 1
    %vm592 = vcmp.eq.s32.totalorder %v584, 1
    %vm593 = vcmp.eq.s32.totalorder %v585, 1
    %vm594 = vmand %vm562, %vm586
    %vm595 = vmand %vm563, %vm587
    %vm596 = vmand %vm564, %vm588
    %vm597 = vmand %vm565, %vm589
    %vm598 = vmand %vm566, %vm590
    %vm599 = vmand %vm567, %vm591
    %vm600 = vmand %vm568, %vm592
    %vm601 = vmand %vm569, %vm593
    %v602 = vsel %vm249, 0.0, -inf
    %v603 = vsel %vm250, 0.0, -inf
    %v604 = vsel %vm251, 0.0, -inf
    %v605 = vsel %vm252, 0.0, -inf
    %v606 = vsel %vm253, 0.0, -inf
    %v607 = vsel %vm254, 0.0, -inf
    %v608 = vsel %vm255, 0.0, -inf
    %v609 = vsel %vm256, 0.0, -inf
    %v610 = vsel %vm594, %v516, %v602
    %v611 = vsel %vm595, %v521, %v603
    %v612 = vsel %vm596, %v526, %v604
    %v613 = vsel %vm597, %v531, %v605
    %v614 = vsel %vm598, %v536, %v606
    %v615 = vsel %vm599, %v541, %v607
    %v616 = vsel %vm600, %v546, %v608
    %v617 = vsel %vm601, %v551, %v609
    %vm618 = vcmask 130048
    %619 = vst.msk [vmem:[#allocation4] sm:$0xff] %vm618, %v610
    %620 = vst.msk [vmem:[#allocation4 + $0x8] sm:$0xff] %vm618, %v611
    %621 = vst.msk [vmem:[#allocation4 + $0x10] sm:$0xff] %vm618, %v612
    %622 = vst.msk [vmem:[#allocation4 + $0x18] sm:$0xff] %vm618, %v613
    %623 = vst.msk [vmem:[#allocation4 + $0x20] sm:$0xff] %vm618, %v614
    %624 = vst.msk [vmem:[#allocation4 + $0x28] sm:$0xff] %vm618, %v615
    %625 = vst.msk [vmem:[#allocation4 + $0x30] sm:$0xff] %vm618, %v616
    %626 = vst.msk [vmem:[#allocation4 + $0x38] sm:$0xff] %vm618, %v617
    %v627 = vld [vmem:[%s6] sm:$0xff]
    %628 = vset.pattern.permute.xlu0 0
    %629 = vperm.xlu0 %628, %v627
    %v630 = vpop.permute.xlu0 %629
    %vm631 = vcmp.eq.s32.totalorder %v52, %v630
    %v632 = vsel %vm41, 1, 0
    %vm633 = vcmp.eq.s32.totalorder %v632, 1
    %vm634 = vmor %vm631, %vm633
    %v635 = vsel %vm634, 0.0, -inf
    %636 = vst.msk [vmem:[#allocation2] sm:$0xff] %vm37, %v635
    // Predicated region
    $region34: #{_actor_forward_core.1} parent=1 // pred_check
      _
    $region35: #{_actor_forward_core.1} parent=1 // pred_check_branch
      %638 = sbr.rel (0) target = $region37
    $region36: #{_actor_forward_core.1} parent=1 // pred_region
      %s640 = ssub.s32 128, 128
      %641 = vsyncadd [#allocation3], %s640
      %s643 = sshll.u32 [#allocation2], 4
      %s644 = int_to_ptr.vmem [resolvable:$true] %s643
      %646 = dma.vmem_to_hbm [thread:$0]  %s644, 128, %s8, [#allocation3]
    $region37: #{_actor_forward_core.1} parent=1 // pred_fallthru
      _
    // Predicated region
    $region38: #{_actor_forward_core.1} parent=1 // pred_check
      _
    $region39: #{_actor_forward_core.1} parent=1 // pred_check_branch
      %648 = sbr.rel (0) target = $region41
    $region40: #{_actor_forward_core.1} parent=1 // pred_region
      %s650 = ssub.s32 1024, 1024
      %651 = vsyncadd [#allocation5], %s650
      %s652 = sshll.u32 [#allocation4], 4
      %s653 = int_to_ptr.vmem [resolvable:$true] %s652
      %658 = dma.vmem_to_hbm [thread:$0]  %s653, 1024, %s9, [#allocation5], 128, 128, 8
    $region41: #{_actor_forward_core.1} parent=1 // pred_fallthru
      _
    // Predicated region
    $region42: #{_actor_forward_core.1} parent=1 // pred_check
      _
    $region43: #{_actor_forward_core.1} parent=1 // pred_check_branch
      %660 = sbr.rel (0) target = $region45
    $region44: #{_actor_forward_core.1} parent=1 // pred_region
      %661 = dma.done [#allocation3], 128
    $region45: #{_actor_forward_core.1} parent=1 // pred_fallthru
      _
    // Predicated region
    $region46: #{_actor_forward_core.1} parent=1 // pred_check
      _
    $region47: #{_actor_forward_core.1} parent=1 // pred_check_branch
      %663 = sbr.rel (0) target = $region49
    $region48: #{_actor_forward_core.1} parent=1 // pred_region
      %664 = dma.done [#allocation5], 1024
    $region49: #{_actor_forward_core.1} parent=1 // pred_fallthru
      _
    %665 = vsyncpa [#allocation3], 1
    %666 = vsyncpa [#allocation5], 1

</llo_original>
